<compile_context>
chip_gen: v7x
topology: tpu7x:2x2x1
jax: 0.10.0
libtpu: 0.0.40
codegen_flags: <defaults>
</compile_context>

<pallas_src>
import jax
import jax.numpy as jnp
from jax.experimental import pallas as pl
from jax.experimental.pallas import tpu as pltpu


def _round_up(x, m):
    return (x + m - 1) // m * m


def _vmem_limit_bytes():
    try:
        phys = int(pltpu.get_tpu_info().vmem_capacity_bytes)
        return min(phys * 3 // 4, 100 * 1024 * 1024)
    except Exception:
        return 32 * 1024 * 1024


# --------------------------------------------------------------------------
# Kernel 1: fused projection  proj = x @ [W_src | W_dst | W_res]  (node-tiled)
#           bf16 MXU operands, f32 accumulation, f32 outputs.
# --------------------------------------------------------------------------
def proj_kernel(x_ref, w_ref, psrc_ref, pdst_ref, pres_ref):
    hdp = psrc_ref.shape[1]
    p = jnp.dot(x_ref[...], w_ref[...], preferred_element_type=jnp.float32)
    psrc_ref[...] = p[:, :hdp]
    pdst_ref[...] = p[:, hdp:2 * hdp]
    pres_ref[...] = p[:, 2 * hdp:]


# --------------------------------------------------------------------------
# Kernel 2: per-edge gather + GATv2 attention logits  (edge-tiled, parallel)
#   srce_out  : gathered src projection rows            (E, HDp)
#   logit_out : per-head attention logit, replicated across each head's
#               D lanes via a block-diagonal 128x128 matmul (lane-dense)
#   tmax_out  : per-tile max of the logits (for the global softmax constant)
# --------------------------------------------------------------------------
def edge_attn_kernel(src_idx_ref, dst_idx_ref,          # scalar-prefetch (SMEM)
                     psrc_ref, pdst_ref, attn_ref, segb_ref,
                     srce_ref, logit_ref, tmax_ref):
    te = srce_ref.shape[0]
    base = pl.program_id(0) * te

    def gather_one(e, carry):
        s = src_idx_ref[base + e]
        d = dst_idx_ref[base + e]
        srow = psrc_ref[pl.ds(s, 1), :]
        drow = pdst_ref[pl.ds(d, 1), :]
        srce_ref[pl.ds(e, 1), :] = srow
        logit_ref[pl.ds(e, 1), :] = srow + drow          # staging buffer
        return carry

    jax.lax.fori_loop(0, te, gather_one, 0, unroll=8)

    t = logit_ref[...]
    t = jnp.where(t >= 0.0, t, 0.2 * t)                  # LeakyReLU(0.2)
    a = (t * attn_ref[...]).astype(jnp.bfloat16)         # * double_attn (bf16 MXU operand)
    logits = jnp.dot(a, segb_ref[...], preferred_element_type=jnp.float32)
    logit_ref[...] = logits
    tmax_ref[...] = jnp.full(tmax_ref.shape, jnp.max(logits), jnp.float32)


# --------------------------------------------------------------------------
# Kernel 3: single-pass softmax scatter-aggregate (edge-tiled, arbitrary)
#   * exp(logit - global_max) numerator/denominator messages (vectorized)
#   * tile-local segment sums via a "same-destination" MXU matmul
#   * one RMW per destination run (dst-sorted edges, run starts prefetched)
#   Output acc = [numerator | denominator]  (Np, 2*HDp), VMEM resident.
# --------------------------------------------------------------------------
def aggregate_kernel(n_runs_ref, run_pos_ref, run_dst_ref,   # scalar-prefetch (SMEM)
                     dstrow_ref, dstcol_ref, src_ref, logit_ref, gmax_ref,
                     acc_ref, part_ref):
    t = pl.program_id(0)

    @pl.when(t == 0)
    def _init():
        acc_ref[...] = jnp.zeros_like(acc_ref)

    gmax = gmax_ref[0, 0]
    p = jnp.exp(logit_ref[...] - gmax)                        # (Te, HDp) f32
    msgs = jnp.concatenate([p * src_ref[...], p], axis=1)     # (Te, 2*HDp)
    # tile-local one-hot scatter on the MXU: same[i,e] = (dst[i] == dst[e])
    same = (dstcol_ref[...] == dstrow_ref[...]).astype(jnp.float32)   # (Te, Te)
    part_ref[...] = jnp.dot(same, msgs, preferred_element_type=jnp.float32)

    nruns = n_runs_ref[t]

    def add_run(r, carry):
        i = run_pos_ref[t, r]
        d = run_dst_ref[t, r]
        acc_ref[pl.ds(d, 1), :] = acc_ref[pl.ds(d, 1), :] + part_ref[pl.ds(i, 1), :]
        return carry

    jax.lax.fori_loop(0, nruns, add_run, 0)


# --------------------------------------------------------------------------
# Kernel 4: finalize (node-tiled, parallel): divide + residual + bias + PReLU
# --------------------------------------------------------------------------
def finalize_kernel(acc_ref, res_ref, bias_ref, prelu_ref, out_ref):
    hdp = out_ref.shape[1]
    num = acc_ref[:, :hdp]
    den = acc_ref[:, hdp:]
    inv = pl.reciprocal(den + 1e-16, approx=True)
    y = num * inv + res_ref[...] + bias_ref[...]
    slope = prelu_ref[0, 0]
    out_ref[...] = jnp.where(y >= 0.0, y, slope * y)


# --------------------------------------------------------------------------
# Wrapper
# --------------------------------------------------------------------------
def gatv2_forward(x, edge_index, batch, params, num_heads, output_dim, num_graphs,
                  node_tile=256, edge_tile=256):
    N, F = x.shape
    H, D = num_heads, output_dim
    HD = H * D
    HDp = _round_up(HD, 128)                              # lane-dense padding
    f32, bf16 = jnp.float32, jnp.bfloat16

    # ---- padded / fused operands (cheap host-side prep) ----
    def pad_cols(w):
        return jnp.pad(w, ((0, 0), (0, HDp - HD)))

    w_fused = jnp.concatenate([pad_cols(params["w_src"]),
                               pad_cols(params["w_dst"]),
                               pad_cols(params["w_res"])], axis=1).astype(bf16)  # (F,3*HDp)
    attn_p = jnp.pad(params["attn_flat"], ((0, 0), (0, HDp - HD))).astype(f32)   # (1,HDp)
    bias_p = jnp.pad(params["bias"], ((0, 0), (0, HDp - HD))).astype(f32)        # (1,HDp)
    # block-diagonal "sum-within-head then broadcast-back" matrix (128x128)
    segb = jnp.zeros((HDp, HDp), f32).at[:HD, :HD].set(
        jnp.kron(jnp.eye(H, dtype=f32), jnp.ones((D, D), f32))).astype(bf16)

    # ---- node padding (>=1 dummy row to absorb padded edges) ----
    node_tile = max(8, min(node_tile, _round_up(N + 1, 8)))
    Np = _round_up(N + 1, node_tile)
    n_node_tiles = Np // node_tile
    x_p = jnp.pad(x, ((0, Np - N), (0, 0))).astype(bf16)

    # ---- edge prep: sort by destination, pad, precompute run metadata ----
    E = edge_index.shape[1]
    edge_tile = max(8, min(edge_tile, _round_up(E, 8)))
    Ep = _round_up(E, edge_tile)
    n_edge_tiles = Ep // edge_tile

    order = jnp.argsort(edge_index[1])
    src_s = jnp.asarray(edge_index[0], jnp.int32)[order]
    dst_s = jnp.asarray(edge_index[1], jnp.int32)[order]
    src_p = jnp.pad(src_s, (0, Ep - E))
    dst_p = jnp.pad(dst_s, (0, Ep - E), constant_values=Np - 1)   # padded edges -> dummy row

    dst2d = dst_p.reshape(n_edge_tiles, edge_tile)                 # row form (VMEM)
    dst_col = dst_p.reshape(Ep, 1)                                 # column form (VMEM)
    prev = jnp.concatenate(
        [jnp.full((n_edge_tiles, 1), -1, jnp.int32), dst2d[:, :-1]], axis=1)
    is_start = dst2d != prev                                       # run starts per tile
    n_runs = jnp.sum(is_start, axis=1).astype(jnp.int32)           # (n_tiles,)
    run_pos = jnp.argsort(jnp.logical_not(is_start), axis=1).astype(jnp.int32)
    run_dst = jnp.take_along_axis(dst2d, run_pos, axis=1).astype(jnp.int32)

    vmem = _vmem_limit_bytes()
    cparams = lambda sem: pltpu.CompilerParams(
        dimension_semantics=sem, vmem_limit_bytes=vmem)

    # ---- kernel 1: fused projections (node-parallel) ----
    psrc, pdst, pres = pl.pallas_call(
        proj_kernel,
        grid=(n_node_tiles,),
        in_specs=[pl.BlockSpec((node_tile, F), lambda i: (i, 0)),
                  pl.BlockSpec((F, 3 * HDp), lambda i: (0, 0))],
        out_specs=[pl.BlockSpec((node_tile, HDp), lambda i: (i, 0))] * 3,
        out_shape=[jax.ShapeDtypeStruct((Np, HDp), f32)] * 3,
        compiler_params=cparams(("parallel",)),
    )(x_p, w_fused)

    # ---- kernel 2: edge gather + attention logits + per-tile max (edge-parallel) ----
    grid2 = pltpu.PrefetchScalarGridSpec(
        num_scalar_prefetch=2,
        grid=(n_edge_tiles,),
        in_specs=[pl.BlockSpec((Np, HDp), lambda t, s, d: (0, 0)),     # psrc (resident)
                  pl.BlockSpec((Np, HDp), lambda t, s, d: (0, 0)),     # pdst (resident)
                  pl.BlockSpec((1, HDp), lambda t, s, d: (0, 0)),      # attn
                  pl.BlockSpec((HDp, HDp), lambda t, s, d: (0, 0))],   # segb
        out_specs=[pl.BlockSpec((edge_tile, HDp), lambda t, s, d: (t, 0)),
                   pl.BlockSpec((edge_tile, HDp), lambda t, s, d: (t, 0)),
                   pl.BlockSpec((1, 128), lambda t, s, d: (t, 0))],
    )
    src_e, logits, tile_max = pl.pallas_call(
        edge_attn_kernel,
        grid_spec=grid2,
        out_shape=[jax.ShapeDtypeStruct((Ep, HDp), f32),
                   jax.ShapeDtypeStruct((Ep, HDp), f32),
                   jax.ShapeDtypeStruct((n_edge_tiles, 128), f32)],
        compiler_params=cparams(("parallel",)),
    )(src_p, dst_p, psrc, pdst, attn_p, segb)

    # global softmax constant (same role as edge_attn.max() in the reference;
    # any constant >= it gives the identical normalized ratio)
    gmax = jnp.max(tile_max).reshape(1, 1).astype(f32)

    # ---- kernel 3: single-pass softmax scatter-aggregate (edge-sequential) ----
    grid3 = pltpu.PrefetchScalarGridSpec(
        num_scalar_prefetch=3,
        grid=(n_edge_tiles,),
        in_specs=[pl.BlockSpec((1, edge_tile), lambda t, a, b, c: (t, 0)),      # dst row
                  pl.BlockSpec((edge_tile, 1), lambda t, a, b, c: (t, 0)),      # dst col
                  pl.BlockSpec((edge_tile, HDp), lambda t, a, b, c: (t, 0)),    # src_e
                  pl.BlockSpec((edge_tile, HDp), lambda t, a, b, c: (t, 0)),    # logits
                  pl.BlockSpec(memory_space=pltpu.MemorySpace.SMEM)],           # gmax
        out_specs=pl.BlockSpec((Np, 2 * HDp), lambda t, a, b, c: (0, 0)),
        scratch_shapes=[pltpu.VMEM((edge_tile, 2 * HDp), f32)],                 # partials
    )
    acc = pl.pallas_call(
        aggregate_kernel,
        grid_spec=grid3,
        out_shape=jax.ShapeDtypeStruct((Np, 2 * HDp), f32),
        compiler_params=cparams(("arbitrary",)),
    )(n_runs, run_pos, run_dst, dst2d, dst_col, src_e, logits, gmax)

    # ---- kernel 4: finalize (node-parallel): divide + residual + bias + PReLU ----
    out_p = pl.pallas_call(
        finalize_kernel,
        grid=(n_node_tiles,),
        in_specs=[pl.BlockSpec((node_tile, 2 * HDp), lambda i: (i, 0)),
                  pl.BlockSpec((node_tile, HDp), lambda i: (i, 0)),
                  pl.BlockSpec((1, HDp), lambda i: (0, 0)),
                  pl.BlockSpec(memory_space=pltpu.MemorySpace.SMEM)],
        out_specs=pl.BlockSpec((node_tile, HDp), lambda i: (i, 0)),
        out_shape=jax.ShapeDtypeStruct((Np, HDp), f32),
        compiler_params=cparams(("parallel",)),
    )(acc, pres, bias_p, params["prelu"])

    out = out_p[:N, :HD]

    # ---- ReadoutPhase ----
    # TODO(synk): ReadoutPhase source was not provided in the module; implemented as the
    # LineEvo convention (sigmoid-gated sum pooling concatenated with max pooling) in plain JAX.
    gate = jax.nn.sigmoid(out @ params["readout_w"] + params["readout_b"])      # (N, 1)
    pooled_sum = jax.ops.segment_sum(gate * out, batch, num_segments=num_graphs)
    pooled_max = jax.ops.segment_max(out, batch, num_segments=num_graphs)
    readout = jnp.concatenate([pooled_sum, pooled_max], axis=1)                 # (G, 2*HD)

    return out, readout


# --------------------------------------------------------------------------
# Pure-JAX reference of the PyTorch forward (eval mode) for validation.
# --------------------------------------------------------------------------
def gatv2_reference(x, edge_index, params, num_heads, output_dim):
    N = x.shape[0]
    H, D = num_heads, output_dim
    hp = jax.lax.Precision.HIGHEST
    src, dst = edge_index[0], edge_index[1]
    sp = jnp.dot(x, params["w_src"], precision=hp).reshape(N, H, D)
    dp = jnp.dot(x, params["w_dst"], precision=hp).reshape(N, H, D)
    attn = params["attn_flat"].reshape(1, H, D)
    e = sp[src] + dp[dst]
    e = jnp.where(e >= 0.0, e, 0.2 * e)
    logit = (attn * e).sum(-1)                                   # (E, H)
    ex = jnp.exp(logit - logit.max())
    den = jax.ops.segment_sum(ex, dst, num_segments=N)           # (N, H)
    alpha = ex / (den[dst] + 1e-16)
    msg = sp[src] * alpha[..., None]
    out = jax.ops.segment_sum(msg, dst, num_segments=N).reshape(N, H * D)
    out = out + jnp.dot(x, params["w_res"], precision=hp) + params["bias"]
    slope = params["prelu"][0, 0]
    return jnp.where(out >= 0.0, out, slope * out)


def xavier_uniform(key, shape):
    fan_in, fan_out = shape[0], shape[1]
    bound = (6.0 / (fan_in + fan_out)) ** 0.5
    return jax.random.uniform(key, shape, jnp.float32, -bound, bound)


if __name__ == "__main__":
    # small deterministic problem: 16 nodes, 8 features, 30 edges, 4 heads x 8 dims, 2 graphs
    N, F, E = 16, 8, 30
    H, D = 4, 8
    HD = H * D
    G = 2

    key = jax.random.PRNGKey(0)
    k_x, k_e1, k_e2, k_wsrc, k_wdst, k_wres, k_attn, k_ro = jax.random.split(key, 8)

    x = jax.random.normal(k_x, (N, F), jnp.float32)
    edge_src = jax.random.randint(k_e1, (E,), 0, N, jnp.int32)
    edge_dst = jax.random.randint(k_e2, (E,), 0, N, jnp.int32)
    edge_index = jnp.stack([edge_src, edge_dst], axis=0)                  # (2, E)
    batch = jnp.concatenate([jnp.zeros(N // 2, jnp.int32),
                             jnp.ones(N - N // 2, jnp.int32)])            # (N,)

    params = {
        # torch stores Linear.weight as (out, in); we keep the transposed (in, out) form.
        "w_src": xavier_uniform(k_wsrc, (F, HD)),
        "w_dst": xavier_uniform(k_wdst, (F, HD)),
        # F != H*D here, so residual_linear is a real Linear(F, H*D) with xavier init.
        "w_res": xavier_uniform(k_wres, (F, HD)),
        "attn_flat": xavier_uniform(k_attn, (H, D)).reshape(1, HD),       # double_attn
        "bias": jnp.zeros((1, HD), jnp.float32),                          # constant_(bias, 0)
        "prelu": jnp.full((1, 1), 0.25, jnp.float32),                     # nn.PReLU default
        "readout_w": xavier_uniform(k_ro, (HD, 1)),
        "readout_b": jnp.zeros((1,), jnp.float32),
    }

    out, graph_out = gatv2_forward(x, edge_index, batch, params,
                                   num_heads=H, output_dim=D, num_graphs=G)
    jax.block_until_ready((out, graph_out))

    assert out.shape == (N, HD) and graph_out.shape == (G, 2 * HD)
    assert bool(jnp.all(jnp.isfinite(out))) and bool(jnp.all(jnp.isfinite(graph_out)))

    ref = gatv2_reference(x, edge_index, params, H, D)
    max_err = float(jnp.max(jnp.abs(out - ref)))
    # bf16 MXU operands + approximate reciprocal -> slightly looser tolerance than pure f32.
    assert max_err < 5e-2, f"mismatch vs pure-JAX reference: max_err={max_err}"

    print("KERNEL_OK")
</pallas_src>

<mosaic_0001>
module attributes {stable_mosaic.version = 11 : i64} {
  func.func @proj_kernel(%arg0: i32, %arg1: memref<24x8xbf16, #tpu.memory_space<vmem>>, %arg2: memref<8x384xbf16, #tpu.memory_space<vmem>>, %arg3: memref<24x128xf32, #tpu.memory_space<vmem>>, %arg4: memref<24x128xf32, #tpu.memory_space<vmem>>, %arg5: memref<24x128xf32, #tpu.memory_space<vmem>>) attributes {dimension_semantics = [#tpu.dimension_semantics<parallel>], iteration_bounds = array<i64: 1>, scalar_prefetch = 0 : i64, scratch_operands = 0 : i64, tpu.core_type = #tpu.core_type<tc>, window_params = [{transform_indices = @transform_0, window_bounds = array<i64: 24, 8>}, {pipeline_mode = #tpu.pipeline_mode<synchronous>, transform_indices = @transform_1, window_bounds = array<i64: 8, 384>}, {transform_indices = @transform_2, window_bounds = array<i64: 24, 128>}, {transform_indices = @transform_3, window_bounds = array<i64: 24, 128>}, {transform_indices = @transform_4, window_bounds = array<i64: 24, 128>}]} {
    %c0 = arith.constant 0 : index
    %c0_0 = arith.constant 0 : index
    %0 = vector.load %arg1[%c0, %c0_0] : memref<24x8xbf16, #tpu.memory_space<vmem>>, vector<24x8xbf16>
    %c0_1 = arith.constant 0 : index
    %c0_2 = arith.constant 0 : index
    %1 = vector.load %arg2[%c0_1, %c0_2] : memref<8x384xbf16, #tpu.memory_space<vmem>>, vector<8x384xbf16>
    %cst = arith.constant dense<0.000000e+00> : vector<24x384xf32>
    %2 = tpu.matmul %0, %1, %cst {dimension_numbers = #tpu.dot_dimension_numbers<[1], [0], [0], [1], [0, 0, 1, 1], [], []>} : vector<24x8xbf16>, vector<8x384xbf16>, vector<24x384xf32> -> vector<24x384xf32>
    %3 = vector.extract_strided_slice %2 {offsets = [0, 0], sizes = [24, 128], strides = [1, 1]} : vector<24x384xf32> to vector<24x128xf32>
    %c0_3 = arith.constant 0 : index
    %c0_4 = arith.constant 0 : index
    %4 = vector.load %arg3[%c0_3, %c0_4] : memref<24x128xf32, #tpu.memory_space<vmem>>, vector<24x128xf32>
    tpu.vector_store %arg3[%c0_3, %c0_4], %3 {strides = array<i32>} : memref<24x128xf32, #tpu.memory_space<vmem>>, vector<24x128xf32>,
    %5 = vector.extract_strided_slice %2 {offsets = [0, 128], sizes = [24, 128], strides = [1, 1]} : vector<24x384xf32> to vector<24x128xf32>
    %c0_5 = arith.constant 0 : index
    %c0_6 = arith.constant 0 : index
    %6 = vector.load %arg4[%c0_5, %c0_6] : memref<24x128xf32, #tpu.memory_space<vmem>>, vector<24x128xf32>
    tpu.vector_store %arg4[%c0_5, %c0_6], %5 {strides = array<i32>} : memref<24x128xf32, #tpu.memory_space<vmem>>, vector<24x128xf32>,
    %7 = vector.extract_strided_slice %2 {offsets = [0, 256], sizes = [24, 128], strides = [1, 1]} : vector<24x384xf32> to vector<24x128xf32>
    %c0_7 = arith.constant 0 : index
    %c0_8 = arith.constant 0 : index
    %8 = vector.load %arg5[%c0_7, %c0_8] : memref<24x128xf32, #tpu.memory_space<vmem>>, vector<24x128xf32>
    tpu.vector_store %arg5[%c0_7, %c0_8], %7 {strides = array<i32>} : memref<24x128xf32, #tpu.memory_space<vmem>>, vector<24x128xf32>,
    return
  }
  func.func @transform_0(%arg0: i32) -> (i32, i32) {
    %c0_i32 = arith.constant 0 : i32
    %c0_i32_0 = arith.constant 0 : i32
    return %arg0, %c0_i32 : i32, i32
  }
  func.func @transform_1(%arg0: i32) -> (i32, i32) {
    %c0_i32 = arith.constant 0 : i32
    %c0_i32_0 = arith.constant 0 : i32
    %c0_i32_1 = arith.constant 0 : i32
    return %c0_i32, %c0_i32_0 : i32, i32
  }
  func.func @transform_2(%arg0: i32) -> (i32, i32) {
    %c0_i32 = arith.constant 0 : i32
    %c0_i32_0 = arith.constant 0 : i32
    return %arg0, %c0_i32 : i32, i32
  }
  func.func @transform_3(%arg0: i32) -> (i32, i32) {
    %c0_i32 = arith.constant 0 : i32
    %c0_i32_0 = arith.constant 0 : i32
    return %arg0, %c0_i32 : i32, i32
  }
  func.func @transform_4(%arg0: i32) -> (i32, i32) {
    %c0_i32 = arith.constant 0 : i32
    %c0_i32_0 = arith.constant 0 : i32
    return %arg0, %c0_i32 : i32, i32
  }
}

</mosaic_0001>

<llo_original>
// kernel: tpu_custom_call.1
$region0: #{tpu_custom_call.1}
  #allocation0 [shape = 'u32[]', space=smem, size = 0x4, offset = 0x4, fixed_abs, tag = 'smem constant byte address 0x4 - core index']
  #allocation1 [shape = 'u32[144,128]{1,0:T(1,128)}', space=vmem, size = 0x12000, scoped, tag = 'internal scratch']
  %s0 = inlined_call_operand.vmem [shape: bf16[24,8], index: 0, kind: input, shape index: {}]
  %s1 = inlined_call_operand.vmem [shape: bf16[8,384], index: 1, kind: input, shape index: {}]
  %s2 = inlined_call_operand.hbm [shape: f32[24,128], index: 2, kind: output, shape index: {0}]
  %s3 = inlined_call_operand.hbm [shape: f32[24,128], index: 3, kind: output, shape index: {1}]
  %s4 = inlined_call_operand.hbm [shape: f32[24,128], index: 4, kind: output, shape index: {2}]
  %5 = xla_tuple %s2, %s3, %s4
  %s6 = sld [smem:[#allocation0]]
  $region34: #{tpu_custom_call.1} parent=0
    _
  %s8 = ssub.s32 1, %s6
  %s9 = scalar_select 0, %s8, %s6
  $region1: #{tpu_custom_call.1} parent=0
    #allocation2 [shape = 'u8[12288]{0}', space=vmem, size = 0x3000, scoped, tag = 'output window, operand 0, single buffered']
    #allocation3 [shape = 's32[1]{0}', space=sflag, size = 0x4, scoped, tag = 'scoped memory for tpu_custom_call.1']
    #allocation4 [shape = 'u8[12288]{0}', space=vmem, size = 0x3000, scoped, tag = 'output window, operand 1, single buffered']
    #allocation5 [shape = 's32[1]{0}', space=sflag, size = 0x4, scoped, tag = 'scoped memory for tpu_custom_call.1']
    #allocation6 [shape = 'u8[12288]{0}', space=vmem, size = 0x3000, scoped, tag = 'output window, operand 2, single buffered']
    %10 = vsyncpa [#allocation3], 0
    %11 = vsyncpa [#allocation5], 0
    // Predicated region
    $region2: #{tpu_custom_call.1} parent=1 // pred_check
      _
    $region3: #{tpu_custom_call.1} parent=1 // pred_check_branch
      %13 = sbr.rel (0) target = $region5
    $region4: #{tpu_custom_call.1} parent=1 // pred_region
      _
    $region5: #{tpu_custom_call.1} parent=1 // pred_fallthru
      _
    // Predicated region
    $region6: #{tpu_custom_call.1} parent=1 // pred_check
      _
    $region7: #{tpu_custom_call.1} parent=1 // pred_check_branch
      %15 = sbr.rel (0) target = $region9
    $region8: #{tpu_custom_call.1} parent=1 // pred_region
      _
    $region9: #{tpu_custom_call.1} parent=1 // pred_fallthru
      _
    %v17 = vld [vmem:[%s0] sm:$0xf]
    %v18 = vld [vmem:[%s0 + $0x4] sm:$0xf]
    %v19 = vld [vmem:[%s0 + $0x8] sm:$0xf]
    %v20 = vld [vmem:[%s1] sm:$0xff]
    %v21 = vld [vmem:[%s1 + $0x8] sm:$0xf]
    %v25 = vunpack.c.l.b16 %v17
    %v26 = vunpack.c.l.b16 %v18
    %v27 = vunpack.c.l.b16 %v19
    %v28 = vpack.c.b16 %v26, %v25
    %v29 = vpack.c.b16 %v27, %v27
    %v32 = vunpack.c.l.b16 %v20
    %v33 = vunpack.c.h.b16 %v20
    %v34 = vunpack.c.l.b16 %v21
    %v35 = vpack.c.b16 %v32, %v32
    %v36 = vpack.c.b16 %v33, %v33
    %v37 = vpack.c.b16 %v34, %v34
    %vm38 = vcmask 64512
    %v40 = vsel %vm38, %v28, 0
    %v43 = vsel %vm38, %v29, 0
    %vm45 = vcmask 1043456
    %v47 = vsel %vm45, %v35, 0
    %v50 = vsel %vm45, %v36, 0
    %v53 = vsel %vm45, %v37, 0
    %55 = vmatprep.subr.bf16.mxu0 %v50
    %56 = vmatpush1.bf16.msra.mxu0 %v47
    %57 = vmatprep.subr.bf16.mxu0 0
    %58 = vmatpush1.bf16.msra.mxu0 0
    %59 = vmatprep.subr.bf16.mxu0 0
    %60 = vmatpush1.bf16.msra.mxu0 0
    %61 = vmatprep.subr.bf16.mxu0 0
    %62 = vmatpush1.bf16.msra.mxu0 0
    %63 = vmatprep.subr.bf16.mxu0 0
    %64 = vmatpush1.bf16.msra.mxu0 0
    %65 = vmatprep.subr.bf16.mxu0 0
    %66 = vmatpush1.bf16.msra.mxu0 0
    %67 = vmatprep.subr.bf16.mxu0 0
    %68 = vmatpush1.bf16.msra.mxu0 0
    %69 = vmatprep.subr.bf16.mxu0 0
    %70 = vmatpush1.bf16.msra.mxu0 0
    %71 = vmatprep.subr.bf16.mxu0 0
    %72 = vmatpush1.bf16.msra.mxu0 0
    %73 = vmatprep.subr.bf16.mxu0 0
    %74 = vmatpush1.bf16.msra.mxu0 0
    %75 = vmatprep.subr.bf16.mxu0 0
    %76 = vmatpush1.bf16.msra.mxu0 0
    %77 = vmatprep.subr.bf16.mxu0 0
    %78 = vmatpush1.bf16.msra.mxu0 0
    %79 = vmatprep.subr.bf16.mxu0 0
    %80 = vmatpush1.bf16.msra.mxu0 0
    %81 = vmatprep.subr.bf16.mxu0 0
    %82 = vmatpush1.bf16.msra.mxu0 0
    %83 = vmatprep.subr.bf16.mxu0 0
    %84 = vmatpush1.bf16.msra.mxu0 0
    %85 = vmatprep.subr.bf16.mxu0 0
    %86 = vmatpush1.bf16.msra.mxu0 0
    %87 = vmatprep.mubr.bf16.mxu0 0
    %88 = vmatmul.mubr.bf16.gmra.mrb[0].mxu0 %v40
    %v89 = vpop.f32.mrb[0].mxu0
    %v90 = vadd.f32 0.0, %v89
    %v91 = vpop.f32.mrb[0].mxu0
    %v92 = vadd.f32 0.0, %v91
    %v93 = vpop.f32.mrb[0].mxu0
    %v94 = vadd.f32 0.0, %v93
    %v95 = vpop.f32.mrb[0].mxu0
    %v96 = vadd.f32 0.0, %v95
    %97 = vmatprep.mubr.bf16.mxu0 0
    %98 = vmatmul.mubr.bf16.gmra.mrb[0].mxu0 %v43
    %v99 = vpop.f32.mrb[0].mxu0
    %v100 = vadd.f32 0.0, %v99
    %v101 = vpop.f32.mrb[0].mxu0
    %v102 = vadd.f32 0.0, %v101
    %v103 = vpop.f32.mrb[0].mxu0
    %v104 = vpop.f32.mrb[0].mxu0
    %105 = vdwg.mxu0
    %106 = vmatprep.subr.bf16.mxu0 0
    %107 = vmatpush1.bf16.msra.mxu0 %v53
    %108 = vmatprep.subr.bf16.mxu0 0
    %109 = vmatpush1.bf16.msra.mxu0 0
    %110 = vmatprep.subr.bf16.mxu0 0
    %111 = vmatpush1.bf16.msra.mxu0 0
    %112 = vmatprep.subr.bf16.mxu0 0
    %113 = vmatpush1.bf16.msra.mxu0 0
    %114 = vmatprep.subr.bf16.mxu0 0
    %115 = vmatpush1.bf16.msra.mxu0 0
    %116 = vmatprep.subr.bf16.mxu0 0
    %117 = vmatpush1.bf16.msra.mxu0 0
    %118 = vmatprep.subr.bf16.mxu0 0
    %119 = vmatpush1.bf16.msra.mxu0 0
    %120 = vmatprep.subr.bf16.mxu0 0
    %121 = vmatpush1.bf16.msra.mxu0 0
    %122 = vmatprep.subr.bf16.mxu0 0
    %123 = vmatpush1.bf16.msra.mxu0 0
    %124 = vmatprep.subr.bf16.mxu0 0
    %125 = vmatpush1.bf16.msra.mxu0 0
    %126 = vmatprep.subr.bf16.mxu0 0
    %127 = vmatpush1.bf16.msra.mxu0 0
    %128 = vmatprep.subr.bf16.mxu0 0
    %129 = vmatpush1.bf16.msra.mxu0 0
    %130 = vmatprep.subr.bf16.mxu0 0
    %131 = vmatpush1.bf16.msra.mxu0 0
    %132 = vmatprep.subr.bf16.mxu0 0
    %133 = vmatpush1.bf16.msra.mxu0 0
    %134 = vmatprep.subr.bf16.mxu0 0
    %135 = vmatpush1.bf16.msra.mxu0 0
    %136 = vmatprep.subr.bf16.mxu0 0
    %137 = vmatpush1.bf16.msra.mxu0 0
    %138 = vmatprep.mubr.bf16.mxu0 0
    %139 = vmatmul.mubr.bf16.gmra.mrb[0].mxu0 %v40
    %v140 = vpop.f32.mrb[0].mxu0
    %v141 = vadd.f32 0.0, %v140
    %v142 = vpop.f32.mrb[0].mxu0
    %v143 = vpop.f32.mrb[0].mxu0
    %v144 = vadd.f32 0.0, %v143
    %v145 = vpop.f32.mrb[0].mxu0
    %146 = vmatprep.mubr.bf16.mxu0 0
    %147 = vmatmul.mubr.bf16.gmra.mrb[0].mxu0 %v43
    %v148 = vpop.f32.mrb[0].mxu0
    %v149 = vadd.f32 0.0, %v148
    %v150 = vpop.f32.mrb[0].mxu0
    %v151 = vpop.f32.mrb[0].mxu0
    %v152 = vpop.f32.mrb[0].mxu0
    %153 = vdwg.mxu0
    %154 = vst [vmem:[#allocation2] sm:$0xff] %v90
    %155 = vst [vmem:[#allocation2 + $0x8] sm:$0xff] %v94
    %156 = vst [vmem:[#allocation2 + $0x10] sm:$0xff] %v100
    %157 = vst [vmem:[#allocation4] sm:$0xff] %v92
    %158 = vst [vmem:[#allocation4 + $0x8] sm:$0xff] %v96
    %159 = vst [vmem:[#allocation4 + $0x10] sm:$0xff] %v102
    %160 = vst [vmem:[#allocation6] sm:$0xff] %v141
    %161 = vst [vmem:[#allocation6 + $0x8] sm:$0xff] %v144
    %162 = vst [vmem:[#allocation6 + $0x10] sm:$0xff] %v149
    // Predicated region
    $region10: #{tpu_custom_call.1} parent=1 // pred_check
      _
    $region11: #{tpu_custom_call.1} parent=1 // pred_check_branch
      %164 = sbr.rel (0) target = $region13
    $region12: #{tpu_custom_call.1} parent=1 // pred_region
      %s166 = ssub.s32 384, 384
      %167 = vsyncadd [#allocation3], %s166
      %s168 = sshll.u32 [#allocation2], 4
      %s169 = int_to_ptr.vmem [resolvable:$true] %s168
      %174 = dma.vmem_to_hbm [thread:$0]  %s169, 384, %s2, [#allocation3], 128, 128, 8
    $region13: #{tpu_custom_call.1} parent=1 // pred_fallthru
      _
    // Predicated region
    $region14: #{tpu_custom_call.1} parent=1 // pred_check
      _
    $region15: #{tpu_custom_call.1} parent=1 // pred_check_branch
      %176 = sbr.rel (0) target = $region17
    $region16: #{tpu_custom_call.1} parent=1 // pred_region
      %s178 = ssub.s32 384, 384
      %179 = vsyncadd [#allocation5], %s178
      %s180 = sshll.u32 [#allocation4], 4
      %s181 = int_to_ptr.vmem [resolvable:$true] %s180
      %186 = dma.vmem_to_hbm [thread:$0]  %s181, 384, %s3, [#allocation5], 128, 128, 8
    $region17: #{tpu_custom_call.1} parent=1 // pred_fallthru
      _
    // Predicated region
    $region18: #{tpu_custom_call.1} parent=1 // pred_check
      _
    $region19: #{tpu_custom_call.1} parent=1 // pred_check_branch
      %188 = sbr.rel (0) target = $region21
    $region20: #{tpu_custom_call.1} parent=1 // pred_region
      %s190 = ssub.s32 384, 384
      %191 = vsyncadd [#allocation5], %s190
      %s192 = sshll.u32 [#allocation6], 4
      %s193 = int_to_ptr.vmem [resolvable:$true] %s192
      %198 = dma.vmem_to_hbm [thread:$0]  %s193, 384, %s4, [#allocation5], 128, 128, 8
    $region21: #{tpu_custom_call.1} parent=1 // pred_fallthru
      _
    // Predicated region
    $region22: #{tpu_custom_call.1} parent=1 // pred_check
      _
    $region23: #{tpu_custom_call.1} parent=1 // pred_check_branch
      %200 = sbr.rel (0) target = $region25
    $region24: #{tpu_custom_call.1} parent=1 // pred_region
      %201 = dma.done [#allocation3], 384
    $region25: #{tpu_custom_call.1} parent=1 // pred_fallthru
      _
    // Predicated region
    $region26: #{tpu_custom_call.1} parent=1 // pred_check
      _
    $region27: #{tpu_custom_call.1} parent=1 // pred_check_branch
      %203 = sbr.rel (0) target = $region29
    $region28: #{tpu_custom_call.1} parent=1 // pred_region
      %204 = dma.done [#allocation5], 384
    $region29: #{tpu_custom_call.1} parent=1 // pred_fallthru
      _
    // Predicated region
    $region30: #{tpu_custom_call.1} parent=1 // pred_check
      _
    $region31: #{tpu_custom_call.1} parent=1 // pred_check_branch
      %206 = sbr.rel (0) target = $region33
    $region32: #{tpu_custom_call.1} parent=1 // pred_region
      %207 = dma.done [#allocation5], 384
    $region33: #{tpu_custom_call.1} parent=1 // pred_fallthru
      _
    %208 = vsyncpa [#allocation3], 1
    %209 = vsyncpa [#allocation5], 1

</llo_original>
